<compile_context>
chip_gen: v7x
topology: tpu7x:2x2x1
jax: 0.10.0
libtpu: 0.0.40
codegen_flags: <defaults>
</compile_context>

<pallas_src>
import jax
import jax.numpy as jnp
from jax.experimental import pallas as pl
from jax.experimental.pallas import tpu as pltpu


def _round_up(x, m):
    return (x + m - 1) // m * m


def _pick_tm(m):
    """M-tile size: multiple of 16 (bf16 sublane pack), <= 256, minimal padding."""
    m16 = _round_up(max(m, 16), 16)
    if m16 <= 256:
        return m16
    nblk = -(-m16 // 256)
    return _round_up(-(-m16 // nblk), 16)


# ---------------------------------------------------------------------------
# Pallas kernels
# ---------------------------------------------------------------------------
def _gemm_bias_relu_kernel(a_ref, b_ref, bias_ref, o_ref):
    # Single k-step fused GEMM: bf16 x bf16 -> f32 acc, + bias, ReLU, cast out.
    acc = jnp.dot(a_ref[...], b_ref[...], preferred_element_type=jnp.float32)
    o_ref[...] = jnp.maximum(acc + bias_ref[...], 0.0).astype(o_ref.dtype)


def _fc_head_kernel(x_ref, w1_ref, b1_ref, w2_ref, b2_ref, o_ref):
    # Fused Linear(3136,512) + ReLU + Linear(512,1) (w2 padded to 128 lanes).
    h = jnp.dot(x_ref[...], w1_ref[...], preferred_element_type=jnp.float32)
    h = jnp.maximum(h + b1_ref[...], 0.0)
    o = jnp.dot(h.astype(jnp.bfloat16), w2_ref[...],
                preferred_element_type=jnp.float32)
    o_ref[...] = (o + b2_ref[...]).astype(o_ref.dtype)


# ---------------------------------------------------------------------------
# Kernel wrappers
# ---------------------------------------------------------------------------
def _gemm_bias_relu(a, w_p, bias_p, oc, out_dtype=jnp.bfloat16):
    """relu(a @ w_p + bias_p)[:M, :oc].  a: (M, K) bf16; w_p: (Kp, Np) bf16."""
    M, K = a.shape
    Kp, Np = w_p.shape
    tm = _pick_tm(M)
    Mp = _round_up(M, tm)
    tn = Np if Np <= 512 else 128  # conv layers all have Np == 128

    a_p = a
    if (M, K) != (Mp, Kp):
        a_p = (jnp.zeros((Mp, Kp), jnp.bfloat16)
               .at[:M, :K].set(a.astype(jnp.bfloat16)))

    grid = (Mp // tm, Np // tn)
    out = pl.pallas_call(
        _gemm_bias_relu_kernel,
        out_shape=jax.ShapeDtypeStruct((Mp, Np), out_dtype),
        grid_spec=pltpu.PrefetchScalarGridSpec(
            num_scalar_prefetch=0,
            grid=grid,
            in_specs=[
                pl.BlockSpec((tm, Kp), lambda i, j: (i, 0)),
                pl.BlockSpec((Kp, tn), lambda i, j: (0, j)),
                pl.BlockSpec((1, tn), lambda i, j: (0, j)),
            ],
            out_specs=pl.BlockSpec((tm, tn), lambda i, j: (i, j)),
        ),
        compiler_params=pltpu.CompilerParams(
            dimension_semantics=("parallel", "parallel")),
    )(a_p, w_p, bias_p)
    return out[:M, :oc]


def _fc_head(x, fc):
    """Fused FC1+ReLU+FC2.  x: (M, 3136) bf16 -> (M, 1) f32."""
    M, K = x.shape
    K1p, N1 = fc["w1"].shape          # (3200, 512)
    N2p = fc["w2"].shape[1]           # 128
    tm = _pick_tm(M)
    Mp = _round_up(M, tm)

    x_p = (jnp.zeros((Mp, K1p), jnp.bfloat16)
           .at[:M, :K].set(x.astype(jnp.bfloat16)))

    out = pl.pallas_call(
        _fc_head_kernel,
        out_shape=jax.ShapeDtypeStruct((Mp, N2p), jnp.float32),
        grid_spec=pltpu.PrefetchScalarGridSpec(
            num_scalar_prefetch=0,
            grid=(Mp // tm,),
            in_specs=[
                pl.BlockSpec((tm, K1p), lambda i: (i, 0)),
                pl.BlockSpec((K1p, N1), lambda i: (0, 0)),
                pl.BlockSpec((1, N1), lambda i: (0, 0)),
                pl.BlockSpec((N1, N2p), lambda i: (0, 0)),
                pl.BlockSpec((1, N2p), lambda i: (0, 0)),
            ],
            out_specs=pl.BlockSpec((tm, N2p), lambda i: (i, 0)),
        ),
        compiler_params=pltpu.CompilerParams(
            dimension_semantics=("parallel",)),
    )(x_p, fc["w1"], fc["b1"], fc["w2"], fc["b2"])
    return out[:M, :1]


# ---------------------------------------------------------------------------
# Conv2d (valid padding) via NHWC im2col + fused Pallas GEMM
# ---------------------------------------------------------------------------
def _im2col_nhwc(x, kh, kw, stride):
    # x: (N, H, W, C) -> (N*Ho*Wo, kh*kw*C), feature order (kh, kw, C)
    n, h, w, c = x.shape
    ho = (h - kh) // stride + 1
    wo = (w - kw) // stride + 1
    cols = []
    for i in range(kh):
        for j in range(kw):
            cols.append(x[:, i:i + stride * ho:stride, j:j + stride * wo:stride, :])
    p = jnp.concatenate(cols, axis=-1)               # (n, ho, wo, kh*kw*c)
    return p.reshape(n * ho * wo, kh * kw * c), ho, wo


def conv2d_relu(x, cp, stride):
    # x: (N, H, W, C) bf16; cp: prepared conv params
    n = x.shape[0]
    patches, ho, wo = _im2col_nhwc(x, cp["kh"], cp["kw"], stride)
    y = _gemm_bias_relu(patches, cp["w"], cp["b"], cp["oc"])
    return y.reshape(n, ho, wo, cp["oc"])            # stays NHWC, bf16


# ---------------------------------------------------------------------------
# Parameters: PyTorch-layout init + one-time prep (permute / pad / bf16 cast)
# ---------------------------------------------------------------------------
def init_params(key, in_channels):
    ks = jax.random.split(key, 10)

    def uinit(k, shape, fan_in):
        bound = 1.0 / jnp.sqrt(float(fan_in))
        return jax.random.uniform(k, shape, jnp.float32, -bound, bound)

    p = {}
    p["c1w"] = uinit(ks[0], (32, in_channels, 8, 8), in_channels * 8 * 8)
    p["c1b"] = uinit(ks[1], (32,), in_channels * 8 * 8)
    p["c2w"] = uinit(ks[2], (64, 32, 4, 4), 32 * 4 * 4)
    p["c2b"] = uinit(ks[3], (64,), 32 * 4 * 4)
    p["c3w"] = uinit(ks[4], (64, 64, 3, 3), 64 * 3 * 3)
    p["c3b"] = uinit(ks[5], (64,), 64 * 3 * 3)
    p["f1w"] = uinit(ks[6], (512, 7 * 7 * 64), 7 * 7 * 64)   # PyTorch (out, in)
    p["f1b"] = uinit(ks[7], (512,), 7 * 7 * 64)
    p["f2w"] = uinit(ks[8], (1, 512), 512)
    p["f2b"] = uinit(ks[9], (1,), 512)
    return p


def _prep_conv(w, b):
    oc, c, kh, kw = w.shape
    K = kh * kw * c
    Kp = _round_up(K, 128)
    Np = _round_up(oc, 128)
    # OIHW -> (kh, kw, C, OC) so rows match NHWC im2col feature order
    wmat = jnp.transpose(w, (2, 3, 1, 0)).reshape(K, oc)
    w_p = (jnp.zeros((Kp, Np), jnp.bfloat16)
           .at[:K, :oc].set(wmat.astype(jnp.bfloat16)))
    b_p = jnp.zeros((1, Np), jnp.float32).at[0, :oc].set(b.astype(jnp.float32))
    return dict(w=w_p, b=b_p, kh=kh, kw=kw, oc=oc)


def _prep_fc(f1w, f1b, f2w, f2b):
    # PyTorch flatten is over NCHW (C=64, H=7, W=7); our activations are NHWC,
    # so permute FC1 in-features to (H, W, C) order once here.
    n1, k1 = f1w.shape                                # (512, 3136)
    w1 = (f1w.reshape(n1, 64, 7, 7)
              .transpose(0, 2, 3, 1)
              .reshape(n1, k1)).T                     # (3136, 512), (h,w,c)-major
    K1p = _round_up(k1, 128)                          # 3200
    w1_p = (jnp.zeros((K1p, n1), jnp.bfloat16)
            .at[:k1, :].set(w1.astype(jnp.bfloat16)))
    b1_p = f1b.astype(jnp.float32).reshape(1, n1)
    N2p = 128
    w2_p = (jnp.zeros((n1, N2p), jnp.bfloat16)
            .at[:, :1].set(f2w.T.astype(jnp.bfloat16)))
    b2_p = jnp.zeros((1, N2p), jnp.float32).at[0, :1].set(f2b.astype(jnp.float32))
    return dict(w1=w1_p, b1=b1_p, w2=w2_p, b2=b2_p)


def prepare_params(params):
    return {
        "c1": _prep_conv(params["c1w"], params["c1b"]),
        "c2": _prep_conv(params["c2w"], params["c2b"]),
        "c3": _prep_conv(params["c3w"], params["c3b"]),
        "fc": _prep_fc(params["f1w"], params["f1b"],
                       params["f2w"], params["f2b"]),
    }


# ---------------------------------------------------------------------------
# ValueNetwork forward: conv(8,4)->ReLU->conv(4,2)->ReLU->conv(3,1)->ReLU->
#                       Flatten->Linear(3136,512)->ReLU->Linear(512,1)
# ---------------------------------------------------------------------------
def value_network_forward(prep, x):
    # x: (N, C, 84, 84) NCHW float32 (PyTorch layout at the boundary)
    h = jnp.transpose(x, (0, 2, 3, 1)).astype(jnp.bfloat16)   # NHWC bf16, once
    h = conv2d_relu(h, prep["c1"], stride=4)                  # (N, 20, 20, 32)
    h = conv2d_relu(h, prep["c2"], stride=2)                  # (N, 9, 9, 64)
    h = conv2d_relu(h, prep["c3"], stride=1)                  # (N, 7, 7, 64)
    n = h.shape[0]
    h = h.reshape(n, -1)                                      # (N, 3136) NHWC-order
    return _fc_head(h, prep["fc"])                            # (N, 1) f32


# ---------------------------------------------------------------------------
# Pure-JAX f32 reference (correctness check only)
# ---------------------------------------------------------------------------
def _reference_forward(params, x):
    dn = ("NCHW", "OIHW", "NCHW")

    def conv(x, w, b, s):
        y = jax.lax.conv_general_dilated(x, w, (s, s), "VALID", dimension_numbers=dn)
        return jax.nn.relu(y + b[None, :, None, None])

    h = conv(x, params["c1w"], params["c1b"], 4)
    h = conv(h, params["c2w"], params["c2b"], 2)
    h = conv(h, params["c3w"], params["c3b"], 1)
    h = h.reshape(h.shape[0], -1)
    h = jax.nn.relu(h @ params["f1w"].T + params["f1b"])
    return h @ params["f2w"].T + params["f2b"]


if __name__ == "__main__":
    key = jax.random.PRNGKey(0)
    k_param, k_x = jax.random.split(key)

    # The Linear(7*7*64, 512) layer pins the spatial size to 84x84 (Atari frames).
    batch, channels, H, W = 2, 4, 84, 84
    x = jax.random.normal(k_x, (batch, channels, H, W), jnp.float32)

    params = init_params(k_param, channels)
    prep = prepare_params(params)           # one-time weight permute/pad/bf16

    out = jax.block_until_ready(value_network_forward(prep, x))
    assert out.shape == (batch, 1), out.shape

    ref = jax.block_until_ready(_reference_forward(params, x))
    # bf16 MXU inputs -> relaxed tolerance vs. the f32 reference
    assert jnp.allclose(out, ref, rtol=5e-2, atol=5e-2), (out, ref)

    print("KERNEL_OK")
</pallas_src>

<mosaic_0001>
module attributes {stable_mosaic.version = 11 : i64} {
  func.func @_gemm_bias_relu_kernel(%arg0: i32, %arg1: i32, %arg2: memref<208x256xbf16, #tpu.memory_space<vmem>>, %arg3: memref<256x128xbf16, #tpu.memory_space<vmem>>, %arg4: memref<1x128xf32, #tpu.memory_space<vmem>>, %arg5: memref<208x128xbf16, #tpu.memory_space<vmem>>) attributes {dimension_semantics = [#tpu.dimension_semantics<parallel>, #tpu.dimension_semantics<parallel>], iteration_bounds = array<i64: 4, 1>, scalar_prefetch = 0 : i64, scratch_operands = 0 : i64, tpu.core_type = #tpu.core_type<tc>, window_params = [{transform_indices = @transform_0, window_bounds = array<i64: 208, 256>}, {transform_indices = @transform_1, window_bounds = array<i64: 256, 128>}, {transform_indices = @transform_2, window_bounds = array<i64: 1, 128>}, {transform_indices = @transform_3, window_bounds = array<i64: 208, 128>}]} {
    %c0 = arith.constant 0 : index
    %c0_0 = arith.constant 0 : index
    %0 = vector.load %arg2[%c0, %c0_0] : memref<208x256xbf16, #tpu.memory_space<vmem>>, vector<208x256xbf16>
    %c0_1 = arith.constant 0 : index
    %c0_2 = arith.constant 0 : index
    %1 = vector.load %arg3[%c0_1, %c0_2] : memref<256x128xbf16, #tpu.memory_space<vmem>>, vector<256x128xbf16>
    %cst = arith.constant dense<0.000000e+00> : vector<208x128xf32>
    %2 = tpu.matmul %0, %1, %cst {dimension_numbers = #tpu.dot_dimension_numbers<[1], [0], [0], [1], [0, 0, 1, 1], [], []>} : vector<208x256xbf16>, vector<256x128xbf16>, vector<208x128xf32> -> vector<208x128xf32>
    %c0_3 = arith.constant 0 : index
    %c0_4 = arith.constant 0 : index
    %3 = vector.load %arg4[%c0_3, %c0_4] : memref<1x128xf32, #tpu.memory_space<vmem>>, vector<1x128xf32>
    %4 = vector.broadcast %3 : vector<1x128xf32> to vector<208x128xf32>
    %5 = arith.addf %2, %4 : vector<208x128xf32>
    %cst_5 = arith.constant 0.000000e+00 : f32
    %6 = vector.broadcast %cst_5 : f32 to vector<208x128xf32>
    %7 = arith.maximumf %5, %6 : vector<208x128xf32>
    %8 = arith.truncf %7 : vector<208x128xf32> to vector<208x128xbf16>
    %c0_6 = arith.constant 0 : index
    %c0_7 = arith.constant 0 : index
    %9 = vector.load %arg5[%c0_6, %c0_7] : memref<208x128xbf16, #tpu.memory_space<vmem>>, vector<208x128xbf16>
    tpu.vector_store %arg5[%c0_6, %c0_7], %8 {strides = array<i32>} : memref<208x128xbf16, #tpu.memory_space<vmem>>, vector<208x128xbf16>,
    return
  }
  func.func @transform_0(%arg0: i32, %arg1: i32) -> (i32, i32) {
    %c0_i32 = arith.constant 0 : i32
    %c0_i32_0 = arith.constant 0 : i32
    return %arg0, %c0_i32 : i32, i32
  }
  func.func @transform_1(%arg0: i32, %arg1: i32) -> (i32, i32) {
    %c0_i32 = arith.constant 0 : i32
    %c0_i32_0 = arith.constant 0 : i32
    return %c0_i32, %arg1 : i32, i32
  }
  func.func @transform_2(%arg0: i32, %arg1: i32) -> (i32, i32) {
    %c0_i32 = arith.constant 0 : i32
    %c0_i32_0 = arith.constant 0 : i32
    return %c0_i32, %arg1 : i32, i32
  }
  func.func @transform_3(%arg0: i32, %arg1: i32) -> (i32, i32) {
    %c0_i32 = arith.constant 0 : i32
    return %arg0, %arg1 : i32, i32
  }
}

</mosaic_0001>

<llo_original>
// kernel: tpu_custom_call.1
$region0: #{tpu_custom_call.1}
  #allocation0 [shape = 'u32[]', space=smem, size = 0x4, offset = 0x4, fixed_abs, tag = 'smem constant byte address 0x4 - core index']
  #allocation1 [shape = 'u32[144,128]{1,0:T(1,128)}', space=vmem, size = 0x12000, scoped, tag = 'internal scratch']
  %s0 = inlined_call_operand.hbm [shape: bf16[832,256], index: 0, kind: input, shape index: {}]
  %s1 = inlined_call_operand.hbm [shape: bf16[256,128], index: 1, kind: input, shape index: {}]
  %s2 = inlined_call_operand.vmem [shape: f32[1,128], index: 2, kind: input, shape index: {}]
  %s3 = inlined_call_operand.hbm [shape: bf16[832,128], index: 3, kind: output, shape index: {}]
  %s4 = sld [smem:[#allocation0]]
  $region53: #{tpu_custom_call.1} parent=0
    _
  %s6 = ssub.s32 1, %s4
  %s7 = scalar_select 0, %s6, %s4
  $region1: #{tpu_custom_call.1} parent=0
    #allocation2 [shape = 'u8[212992]{0}', space=vmem, size = 0x34000, scoped, tag = 'input window, operand 0']
    #allocation3 [shape = 's32[2]{0}', space=sflag, size = 0x8, scoped, tag = 'scoped memory for tpu_custom_call.1']
    #allocation4 [shape = 's32[2]{0}', space=sflag, size = 0x8, scoped, tag = 'scoped memory for tpu_custom_call.1']
    #allocation5 [shape = 'u8[65536]{0}', space=vmem, size = 0x10000, scoped, tag = 'input window, operand 1, single buffered']
    #allocation6 [shape = 's32[1]{0}', space=sflag, size = 0x4, scoped, tag = 'scoped memory for tpu_custom_call.1']
    #allocation7 [shape = 'u8[106496]{0}', space=vmem, size = 0x1a000, scoped, tag = 'output window, operand 0']
    %8 = vsyncpa [#allocation3], 0
    %s9 = scalar_lea.sflag [#allocation3], 1
    %10 = vsyncpa %s9, 0
    %11 = vsyncpa [#allocation6], 0
    %12 = vsyncpa [#allocation4], 0
    %s13 = scalar_lea.sflag [#allocation4], 1
    %14 = vsyncpa %s13, 0
    loop: start=0, step=1, limit=6
    $region2: #{tpu_custom_call.1} parent=1 // loop_pre_header
      _
    $region3: #{tpu_custom_call.1} parent=1 // loop_header
      %s16 = sphi 0, %s20
      %p17 = scmp.ge.s32.totalorder %s16, 6
      %s23 = sphi 0, %s35
      %s24 = sphi 0, %s31
      %s25 = sphi 0, %s23
      %s26 = sphi 0, %s24
      %s27 = sphi 0, %s25
      %s28 = sphi 0, %s26
      %s38 = sphi 0, %s40
      %s41 = sphi 0, %s38
      %s42 = sphi 0, %s41
      %s58 = sphi 0, %s42
      %s64 = sphi 0, %s66
      %s67 = sphi 0, %s64
      %s68 = sphi 0, %s67
      %s84 = sphi 0, %s68
      %s90 = sphi 0, %s92
      %s93 = sphi 0, %s90
      %s94 = sphi 0, %s93
      %s110 = sphi 0, %s94
      %s118 = sphi 0, %s120
      %s121 = sphi 0, %s118
      %s122 = sphi 0, %s121
      %s138 = sphi 0, %s122
    $region4: #{tpu_custom_call.1} parent=1 // loop_header_branch
      %19 = sbr.rel (%p17) target = $region8
    $region5: #{tpu_custom_call.1} parent=1 // loop_body
      %s21 = ssub.s32 %s16, 1
      %s22 = ssub.s32 %s16, 2
      %s29 = sadd.s32 1, %s24
      %p30 = scmp.ge.s32.totalorder %s29, 1
      %s31 = scalar_select %p30, 0, %s29
      %s32 = sadd.s32 1, %s23
      %s33 = scalar_select %p30, %s32, %s23
      %p34 = scmp.ge.s32.totalorder %s33, 4
      %s35 = scalar_select %p34, 0, %s33
      %s36 = ssub.s32 %s23, %s35
      %p37 = scmp.eq.s32.totalorder %s36, 0
      %s39 = sadd.s32 %s38, 1
      %s40 = scalar_select %p37, %s38, %s39
      %p43 = pneg %p37
      %p44 = scmp.eq.s32.totalorder %s16, 3
      %p45 = por %p43, %p44
      %p46 = scmp.ne.s32.totalorder %s38, %s41
      %p47 = scmp.eq.s32.totalorder %s16, 0
      %p48 = por %p46, %p47
      %p49 = scmp.ne.s32.totalorder %s38, %s41
      %p50 = scmp.eq.s32.totalorder %s21, 3
      %p51 = por %p49, %p50
      %p52 = scmp.ne.s32.totalorder %s41, %s42
      %p53 = scmp.eq.s32.totalorder %s21, 0
      %p54 = por %p52, %p53
      %p55 = scmp.ne.s32.totalorder %s41, %s42
      %p56 = scmp.eq.s32.totalorder %s22, 3
      %p57 = por %p55, %p56
      %p59 = scmp.ne.s32.totalorder %s42, %s58
      %p60 = scmp.eq.s32.totalorder %s22, 0
      %p61 = por %p59, %p60
      %s62 = ssub.s32 %s24, %s31
      %p63 = scmp.eq.s32.totalorder %s62, 0
      %s65 = sadd.s32 %s64, 1
      %s66 = scalar_select %p63, %s64, %s65
      %p69 = pneg %p63
      %p70 = scmp.eq.s32.totalorder %s16, 3
      %p71 = por %p69, %p70
      %p72 = scmp.ne.s32.totalorder %s64, %s67
      %p73 = scmp.eq.s32.totalorder %s16, 0
      %p74 = por %p72, %p73
      %p75 = scmp.ne.s32.totalorder %s64, %s67
      %p76 = scmp.eq.s32.totalorder %s21, 3
      %p77 = por %p75, %p76
      %p78 = scmp.ne.s32.totalorder %s67, %s68
      %p79 = scmp.eq.s32.totalorder %s21, 0
      %p80 = por %p78, %p79
      %p81 = scmp.ne.s32.totalorder %s67, %s68
      %p82 = scmp.eq.s32.totalorder %s22, 3
      %p83 = por %p81, %p82
      %p85 = scmp.ne.s32.totalorder %s68, %s84
      %p86 = scmp.eq.s32.totalorder %s22, 0
      %p87 = por %p85, %p86
      %s88 = ssub.s32 %s24, %s31
      %p89 = scmp.eq.s32.totalorder %s88, 0
      %s91 = sadd.s32 %s90, 1
      %s92 = scalar_select %p89, %s90, %s91
      %p95 = pneg %p89
      %p96 = scmp.eq.s32.totalorder %s16, 3
      %p97 = por %p95, %p96
      %p98 = scmp.ne.s32.totalorder %s90, %s93
      %p99 = scmp.eq.s32.totalorder %s16, 0
      %p100 = por %p98, %p99
      %p101 = scmp.ne.s32.totalorder %s90, %s93
      %p102 = scmp.eq.s32.totalorder %s21, 3
      %p103 = por %p101, %p102
      %p104 = scmp.ne.s32.totalorder %s93, %s94
      %p105 = scmp.eq.s32.totalorder %s21, 0
      %p106 = por %p104, %p105
      %p107 = scmp.ne.s32.totalorder %s93, %s94
      %p108 = scmp.eq.s32.totalorder %s22, 3
      %p109 = por %p107, %p108
      %p111 = scmp.ne.s32.totalorder %s94, %s110
      %p112 = scmp.eq.s32.totalorder %s22, 0
      %p113 = por %p111, %p112
      %s114 = ssub.s32 %s23, %s35
      %s115 = ssub.s32 %s24, %s31
      %s116 = sor.u32 %s114, %s115
      %p117 = scmp.eq.s32.totalorder %s116, 0
      %s119 = sadd.s32 %s118, 1
      %s120 = scalar_select %p117, %s118, %s119
      %p123 = pneg %p117
      %p124 = scmp.eq.s32.totalorder %s16, 3
      %p125 = por %p123, %p124
      %p126 = scmp.ne.s32.totalorder %s118, %s121
      %p127 = scmp.eq.s32.totalorder %s16, 0
      %p128 = por %p126, %p127
      %p129 = scmp.ne.s32.totalorder %s118, %s121
      %p130 = scmp.eq.s32.totalorder %s21, 3
      %p131 = por %p129, %p130
      %p132 = scmp.ne.s32.totalorder %s121, %s122
      %p133 = scmp.eq.s32.totalorder %s21, 0
      %p134 = por %p132, %p133
      %p135 = scmp.ne.s32.totalorder %s121, %s122
      %p136 = scmp.eq.s32.totalorder %s22, 3
      %p137 = por %p135, %p136
      %p139 = scmp.ne.s32.totalorder %s122, %s138
      %p140 = scmp.eq.s32.totalorder %s22, 0
      %p141 = por %p139, %p140
      %p142 = scmp.le.s32.totalorder 1, %s16
      %p143 = scmp.lt.s32.totalorder %s16, 5
      %p144 = pnand %p142, %p143
      %p145 = pneg %p144
      // Predicated region
      $region9: #{tpu_custom_call.1} parent=5 // pred_check
        _
      $region10: #{tpu_custom_call.1} parent=5 // pred_check_branch
        %147 = sbr.rel (%p144) target = $region12
      $region11: #{tpu_custom_call.1} parent=5 // pred_region
        %s148 = ssub.s32 %s16, 1
        // Predicated region
        $region13: #{tpu_custom_call.1} parent=11 // pred_check
          %p149 = pneg %p80
        $region14: #{tpu_custom_call.1} parent=11 // pred_check_branch
          %151 = sbr.rel (%p149) target = $region16
        $region15: #{tpu_custom_call.1} parent=11 // pred_region
          %s153 = ssub.s32 2048, 2048
          %154 = vsyncadd [#allocation6], %s153
          %s155 = smul.addr %s26, 64
          %s156 = scalar_lea.hbm %s1, %s155
          %s157 = sshll.u32 [#allocation5], 4
          %s158 = int_to_ptr.vmem [resolvable:$true] %s157
          %163 = dma.hbm_to_vmem [thread:$0]  %s156, 2048, %s158, [#allocation6], 64, 64, 4
        $region16: #{tpu_custom_call.1} parent=11 // pred_fallthru
          _
        // Predicated region
        $region17: #{tpu_custom_call.1} parent=11 // pred_check
          %p164 = pneg %p106
        $region18: #{tpu_custom_call.1} parent=11 // pred_check_branch
          %166 = sbr.rel (%p164) target = $region20
        $region19: #{tpu_custom_call.1} parent=11 // pred_region
          %p167 = scmp.lt.s32.totalorder %s26, 0
          %s168 = scalar_select %p167, %s26, 0
          %s169 = scalar_lea.vmem %s2, %s168
        $region20: #{tpu_custom_call.1} parent=11 // pred_fallthru
          _
      $region12: #{tpu_custom_call.1} parent=5 // pred_fallthru
        _
      %p170 = scmp.lt.s32.totalorder %s16, 4
      // Predicated region
      $region21: #{tpu_custom_call.1} parent=5 // pred_check
        %p171 = pneg %p170
      $region22: #{tpu_custom_call.1} parent=5 // pred_check_branch
        %173 = sbr.rel (%p171) target = $region24
      $region23: #{tpu_custom_call.1} parent=5 // pred_region
        // Predicated region
        $region25: #{tpu_custom_call.1} parent=23 // pred_check
          %p174 = pneg %p48
        $region26: #{tpu_custom_call.1} parent=23 // pred_check_branch
          %176 = sbr.rel (%p174) target = $region28
        $region27: #{tpu_custom_call.1} parent=23 // pred_region
          %s177 = sand.u32 %s38, 1
          %s178 = scalar_lea.sflag [#allocation3], %s177
          %s179 = sand.u32 %s38, 1
          %s180 = smul.addr %s179, 208
          %s181 = scalar_lea.vmem [#allocation2], %s180
          %s182 = smul.u32 26, %s23
          %s184 = ssub.s32 3328, 3328
          %185 = vsyncadd %s178, %s184
          %s186 = smul.addr %s182, 2
          %s187 = smul.addr %s186, 64
          %s188 = scalar_lea.hbm %s0, %s187
          %s189 = sshll.u32 %s181, 4
          %s190 = int_to_ptr.vmem [resolvable:$true] %s189
          %195 = dma.hbm_to_vmem [thread:$0]  %s188, 3328, %s190, %s178, 128, 128, 8
        $region28: #{tpu_custom_call.1} parent=23 // pred_fallthru
          _
      $region24: #{tpu_custom_call.1} parent=5 // pred_fallthru
        _
      %p196 = scmp.le.s32.totalorder 1, %s16
      %p197 = scmp.lt.s32.totalorder %s16, 5
      %p198 = pnand %p196, %p197
      %p199 = pneg %p198
      // Predicated region
      $region29: #{tpu_custom_call.1} parent=5 // pred_check
        _
      $region30: #{tpu_custom_call.1} parent=5 // pred_check_branch
        %201 = sbr.rel (%p198) target = $region32
      $region31: #{tpu_custom_call.1} parent=5 // pred_region
        %s202 = ssub.s32 %s16, 1
        %s203 = sand.u32 %s41, 1
        %s204 = scalar_lea.sflag [#allocation3], %s203
        %s205 = sand.u32 %s41, 1
        %s206 = smul.addr %s205, 208
        %s207 = scalar_lea.vmem [#allocation2], %s206
        // Predicated region
        $region33: #{tpu_custom_call.1} parent=31 // pred_check
          %p208 = pneg %p54
        $region34: #{tpu_custom_call.1} parent=31 // pred_check_branch
          %210 = sbr.rel (%p208) target = $region36
        $region35: #{tpu_custom_call.1} parent=31 // pred_region
          %211 = dma.done %s204, 3328
        $region36: #{tpu_custom_call.1} parent=31 // pred_fallthru
          _
        // Predicated region
        $region37: #{tpu_custom_call.1} parent=31 // pred_check
          %p212 = pneg %p80
        $region38: #{tpu_custom_call.1} parent=31 // pred_check_branch
          %214 = sbr.rel (%p212) target = $region40
        $region39: #{tpu_custom_call.1} parent=31 // pred_region
          %215 = dma.done [#allocation6], 2048
        $region40: #{tpu_custom_call.1} parent=31 // pred_fallthru
          _
        %s216 = sand.u32 %s41, 1
        %s217 = scalar_lea.sflag [#allocation3], %s216
        %s218 = sand.u32 %s41, 1
        %s219 = smul.addr %s218, 208
        %s220 = scalar_lea.vmem [#allocation2], %s219
        %p221 = pneg %p54
        %p222 = pneg %p51
        %p223 = pneg %p80
        %p224 = pneg %p77
        %p225 = scmp.lt.s32.totalorder %s26, 0
        %s226 = scalar_select %p225, %s26, 0
        %s227 = scalar_lea.vmem %s2, %s226
        %p228 = pneg %p106
        %p229 = pneg %p103
        %p230 = pneg %p134
        %p231 = pneg %p131
        %s232 = sand.u32 %s121, 1
        %s233 = scalar_lea.sflag [#allocation4], %s232
        %s234 = sand.u32 %s121, 1
        %s235 = smul.addr %s234, 104
        %s236 = scalar_lea.vmem [#allocation7], %s235
        %s237 = smul.u32 26, %s25
        %p238 = scmp.lt.s32.totalorder %s26, 0
        %s239 = scalar_select %p238, %s26, 0
        %s240 = scalar_lea.vmem %s2, %s239
        %s241 = smul.u32 26, %s25
        %v243 = vld [vmem:[%s207] sm:$0xff]
        %v244 = vld [vmem:[%s207 + $0x8] sm:$0xff]
        %v245 = vld [vmem:[%s207 + $0x10] sm:$0xff]
        %v246 = vld [vmem:[%s207 + $0x18] sm:$0xff]
        %v247 = vld [vmem:[%s207 + $0x20] sm:$0xff]
        %v248 = vld [vmem:[%s207 + $0x28] sm:$0xff]
        %v249 = vld [vmem:[%s207 + $0x30] sm:$0xff]
        %v250 = vld [vmem:[%s207 + $0x38] sm:$0xff]
        %v251 = vld [vmem:[%s207 + $0x40] sm:$0xff]
        %v252 = vld [vmem:[%s207 + $0x48] sm:$0xff]
        %v253 = vld [vmem:[%s207 + $0x50] sm:$0xff]
        %v254 = vld [vmem:[%s207 + $0x58] sm:$0xff]
        %v255 = vld [vmem:[%s207 + $0x60] sm:$0xff]
        %v256 = vld [vmem:[%s207 + $0x68] sm:$0xff]
        %v257 = vld [vmem:[%s207 + $0x70] sm:$0xff]
        %v258 = vld [vmem:[%s207 + $0x78] sm:$0xff]
        %v259 = vld [vmem:[%s207 + $0x80] sm:$0xff]
        %v260 = vld [vmem:[%s207 + $0x88] sm:$0xff]
        %v261 = vld [vmem:[%s207 + $0x90] sm:$0xff]
        %v262 = vld [vmem:[%s207 + $0x98] sm:$0xff]
        %v263 = vld [vmem:[%s207 + $0xa0] sm:$0xff]
        %v264 = vld [vmem:[%s207 + $0xa8] sm:$0xff]
        %v265 = vld [vmem:[%s207 + $0xb0] sm:$0xff]
        %v266 = vld [vmem:[%s207 + $0xb8] sm:$0xff]
        %v267 = vld [vmem:[%s207 + $0xc0] sm:$0xff]
        %v268 = vld [vmem:[%s207 + $0xc8] sm:$0xff]
        %v269 = vld [vmem:[#allocation5] sm:$0xf]
        %v270 = vld [vmem:[#allocation5 + $0x4] sm:$0xf]
        %v271 = vld [vmem:[#allocation5 + $0x8] sm:$0xf]
        %v272 = vld [vmem:[#allocation5 + $0xc] sm:$0xf]
        %v273 = vld [vmem:[#allocation5 + $0x10] sm:$0xf]
        %v274 = vld [vmem:[#allocation5 + $0x14] sm:$0xf]
        %v275 = vld [vmem:[#allocation5 + $0x18] sm:$0xf]
        %v276 = vld [vmem:[#allocation5 + $0x1c] sm:$0xf]
        %v277 = vld [vmem:[#allocation5 + $0x20] sm:$0xf]
        %v278 = vld [vmem:[#allocation5 + $0x24] sm:$0xf]
        %v279 = vld [vmem:[#allocation5 + $0x28] sm:$0xf]
        %v280 = vld [vmem:[#allocation5 + $0x2c] sm:$0xf]
        %v281 = vld [vmem:[#allocation5 + $0x30] sm:$0xf]
        %v282 = vld [vmem:[#allocation5 + $0x34] sm:$0xf]
        %v283 = vld [vmem:[#allocation5 + $0x38] sm:$0xf]
        %v284 = vld [vmem:[#allocation5 + $0x3c] sm:$0xf]
        %v285 = vld [vmem:[#allocation5 + $0x40] sm:$0xf]
        %v286 = vld [vmem:[#allocation5 + $0x44] sm:$0xf]
        %v287 = vld [vmem:[#allocation5 + $0x48] sm:$0xf]
        %v288 = vld [vmem:[#allocation5 + $0x4c] sm:$0xf]
        %v289 = vld [vmem:[#allocation5 + $0x50] sm:$0xf]
        %v290 = vld [vmem:[#allocation5 + $0x54] sm:$0xf]
        %v291 = vld [vmem:[#allocation5 + $0x58] sm:$0xf]
        %v292 = vld [vmem:[#allocation5 + $0x5c] sm:$0xf]
        %v293 = vld [vmem:[#allocation5 + $0x60] sm:$0xf]
        %v294 = vld [vmem:[#allocation5 + $0x64] sm:$0xf]
        %v295 = vld [vmem:[#allocation5 + $0x68] sm:$0xf]
        %v296 = vld [vmem:[#allocation5 + $0x6c] sm:$0xf]
        %v297 = vld [vmem:[#allocation5 + $0x70] sm:$0xf]
        %v298 = vld [vmem:[#allocation5 + $0x74] sm:$0xf]
        %v299 = vld [vmem:[#allocation5 + $0x78] sm:$0xf]
        %v300 = vld [vmem:[#allocation5 + $0x7c] sm:$0xf]
        %v301 = vld [vmem:[%s240] sm:$0x1]
        %v303 = vlaneseq
        %v304 = vshrl.u32 %v303, 7
        %v305 = vsub.s32 0, %v304
        %v306 = vrot.slane %v301, %v305
        %v334 = vunpack.c.l.b16 %v243
        %v335 = vunpack.c.h.b16 %v243
        %v336 = vunpack.c.l.b16 %v244
        %v337 = vunpack.c.h.b16 %v244
        %v338 = vunpack.c.l.b16 %v245
        %v339 = vunpack.c.h.b16 %v245
        %v340 = vunpack.c.l.b16 %v246
        %v341 = vunpack.c.h.b16 %v246
        %v342 = vunpack.c.l.b16 %v247
        %v343 = vunpack.c.h.b16 %v247
        %v344 = vunpack.c.l.b16 %v248
        %v345 = vunpack.c.h.b16 %v248
        %v346 = vunpack.c.l.b16 %v249
        %v347 = vunpack.c.h.b16 %v249
        %v348 = vunpack.c.l.b16 %v250
        %v349 = vunpack.c.h.b16 %v250
        %v350 = vunpack.c.l.b16 %v251
        %v351 = vunpack.c.h.b16 %v251
        %v352 = vunpack.c.l.b16 %v252
        %v353 = vunpack.c.h.b16 %v252
        %v354 = vunpack.c.l.b16 %v253
        %v355 = vunpack.c.h.b16 %v253
        %v356 = vunpack.c.l.b16 %v254
        %v357 = vunpack.c.h.b16 %v254
        %v358 = vunpack.c.l.b16 %v255
        %v359 = vunpack.c.h.b16 %v255
        %v360 = vunpack.c.l.b16 %v256
        %v361 = vunpack.c.h.b16 %v256
        %v362 = vunpack.c.l.b16 %v257
        %v363 = vunpack.c.h.b16 %v257
        %v364 = vunpack.c.l.b16 %v258
        %v365 = vunpack.c.h.b16 %v258
        %v366 = vunpack.c.l.b16 %v259
        %v367 = vunpack.c.h.b16 %v259
        %v368 = vunpack.c.l.b16 %v260
        %v369 = vunpack.c.h.b16 %v260
        %v370 = vunpack.c.l.b16 %v261
        %v371 = vunpack.c.h.b16 %v261
        %v372 = vunpack.c.l.b16 %v262
        %v373 = vunpack.c.h.b16 %v262
        %v374 = vunpack.c.l.b16 %v263
        %v375 = vunpack.c.h.b16 %v263
        %v376 = vunpack.c.l.b16 %v264
        %v377 = vunpack.c.h.b16 %v264
        %v378 = vunpack.c.l.b16 %v265
        %v379 = vunpack.c.h.b16 %v265
        %v380 = vunpack.c.l.b16 %v266
        %v381 = vunpack.c.h.b16 %v266
        %v382 = vunpack.c.l.b16 %v267
        %v383 = vunpack.c.h.b16 %v267
        %v384 = vunpack.c.l.b16 %v268
        %v385 = vunpack.c.h.b16 %v268
        %v386 = vpack.c.b16 %v336, %v334
        %v387 = vpack.c.b16 %v337, %v335
        %v388 = vpack.c.b16 %v340, %v338
        %v389 = vpack.c.b16 %v341, %v339
        %v390 = vpack.c.b16 %v344, %v342
        %v391 = vpack.c.b16 %v345, %v343
        %v392 = vpack.c.b16 %v348, %v346
        %v393 = vpack.c.b16 %v349, %v347
        %v394 = vpack.c.b16 %v352, %v350
        %v395 = vpack.c.b16 %v353, %v351
        %v396 = vpack.c.b16 %v356, %v354
        %v397 = vpack.c.b16 %v357, %v355
        %v398 = vpack.c.b16 %v360, %v358
        %v399 = vpack.c.b16 %v361, %v359
        %v400 = vpack.c.b16 %v364, %v362
        %v401 = vpack.c.b16 %v365, %v363
        %v402 = vpack.c.b16 %v368, %v366
        %v403 = vpack.c.b16 %v369, %v367
        %v404 = vpack.c.b16 %v372, %v370
        %v405 = vpack.c.b16 %v373, %v371
        %v406 = vpack.c.b16 %v376, %v374
        %v407 = vpack.c.b16 %v377, %v375
        %v408 = vpack.c.b16 %v380, %v378
        %v409 = vpack.c.b16 %v381, %v379
        %v410 = vpack.c.b16 %v384, %v382
        %v411 = vpack.c.b16 %v385, %v383
        %v470 = vunpack.c.l.b16 %v269
        %v471 = vunpack.c.l.b16 %v270
        %v472 = vunpack.c.l.b16 %v271
        %v473 = vunpack.c.l.b16 %v272
        %v474 = vunpack.c.l.b16 %v273
        %v475 = vunpack.c.l.b16 %v274
        %v476 = vunpack.c.l.b16 %v275
        %v477 = vunpack.c.l.b16 %v276
        %v478 = vunpack.c.l.b16 %v277
        %v479 = vunpack.c.l.b16 %v278
        %v480 = vunpack.c.l.b16 %v279
        %v481 = vunpack.c.l.b16 %v280
        %v482 = vunpack.c.l.b16 %v281
        %v483 = vunpack.c.l.b16 %v282
        %v484 = vunpack.c.l.b16 %v283
        %v485 = vunpack.c.l.b16 %v284
        %v486 = vunpack.c.l.b16 %v285
        %v487 = vunpack.c.l.b16 %v286
        %v488 = vunpack.c.l.b16 %v287
        %v489 = vunpack.c.l.b16 %v288
        %v490 = vunpack.c.l.b16 %v289
        %v491 = vunpack.c.l.b16 %v290
        %v492 = vunpack.c.l.b16 %v291
        %v493 = vunpack.c.l.b16 %v292
        %v494 = vunpack.c.l.b16 %v293
        %v495 = vunpack.c.l.b16 %v294
        %v496 = vunpack.c.l.b16 %v295
        %v497 = vunpack.c.l.b16 %v296
        %v498 = vunpack.c.l.b16 %v297
        %v499 = vunpack.c.l.b16 %v298
        %v500 = vunpack.c.l.b16 %v299
        %v501 = vunpack.c.l.b16 %v300
        %v502 = vpack.c.b16 %v471, %v470
        %v503 = vpack.c.b16 %v473, %v472
        %v504 = vpack.c.b16 %v475, %v474
        %v505 = vpack.c.b16 %v477, %v476
        %v506 = vpack.c.b16 %v479, %v478
        %v507 = vpack.c.b16 %v481, %v480
        %v508 = vpack.c.b16 %v483, %v482
        %v509 = vpack.c.b16 %v485, %v484
        %v510 = vpack.c.b16 %v487, %v486
        %v511 = vpack.c.b16 %v489, %v488
        %v512 = vpack.c.b16 %v491, %v490
        %v513 = vpack.c.b16 %v493, %v492
        %v514 = vpack.c.b16 %v495, %v494
        %v515 = vpack.c.b16 %v497, %v496
        %v516 = vpack.c.b16 %v499, %v498
        %v517 = vpack.c.b16 %v501, %v500
        %534 = vmatprep.subr.bf16.mxu0 0
        %535 = vmatpush1.bf16.msra.mxu0 %v502
        %536 = vmatprep.subr.bf16.mxu0 0
        %537 = vmatpush1.bf16.msra.mxu0 %v503
        %538 = vmatprep.subr.bf16.mxu0 0
        %539 = vmatpush1.bf16.msra.mxu0 %v504
        %540 = vmatprep.subr.bf16.mxu0 0
        %541 = vmatpush1.bf16.msra.mxu0 %v505
        %542 = vmatprep.subr.bf16.mxu0 0
        %543 = vmatpush1.bf16.msra.mxu0 %v506
        %544 = vmatprep.subr.bf16.mxu0 0
        %545 = vmatpush1.bf16.msra.mxu0 %v507
        %546 = vmatprep.subr.bf16.mxu0 0
        %547 = vmatpush1.bf16.msra.mxu0 %v508
        %548 = vmatprep.subr.bf16.mxu0 0
        %549 = vmatpush1.bf16.msra.mxu0 %v509
        %550 = vmatprep.subr.bf16.mxu0 0
        %551 = vmatpush1.bf16.msra.mxu0 %v510
        %552 = vmatprep.subr.bf16.mxu0 0
        %553 = vmatpush1.bf16.msra.mxu0 %v511
        %554 = vmatprep.subr.bf16.mxu0 0
        %555 = vmatpush1.bf16.msra.mxu0 %v512
        %556 = vmatprep.subr.bf16.mxu0 0
        %557 = vmatpush1.bf16.msra.mxu0 %v513
        %558 = vmatprep.subr.bf16.mxu0 0
        %559 = vmatpush1.bf16.msra.mxu0 %v514
        %560 = vmatprep.subr.bf16.mxu0 0
        %561 = vmatpush1.bf16.msra.mxu0 %v515
        %562 = vmatprep.subr.bf16.mxu0 0
        %563 = vmatpush1.bf16.msra.mxu0 %v516
        %564 = vmatprep.subr.bf16.mxu0 0
        %565 = vmatpush1.bf16.msra.mxu0 %v517
        %566 = vmatprep.mubr.bf16.mxu0 %v387
        %567 = vmatmul.mubr.bf16.gmra.mrb[0].mxu0 %v386
        %v568 = vpop.f32.mrb[0].mxu0
        %v569 = vadd.f32 %v306, %v568
        %v570 = vpop.f32.mrb[0].mxu0
        %v571 = vpop.f32.mrb[0].mxu0
        %v572 = vadd.f32 %v306, %v571
        %v573 = vpop.f32.mrb[0].mxu0
        %574 = vmatprep.mubr.bf16.mxu0 %v389
        %575 = vmatmul.mubr.bf16.gmra.mrb[0].mxu0 %v388
        %v576 = vpop.f32.mrb[0].mxu0
        %v577 = vadd.f32 %v306, %v576
        %v578 = vpop.f32.mrb[0].mxu0
        %v579 = vpop.f32.mrb[0].mxu0
        %v580 = vadd.f32 %v306, %v579
        %v581 = vpop.f32.mrb[0].mxu0
        %582 = vmatprep.mubr.bf16.mxu0 %v391
        %583 = vmatmul.mubr.bf16.gmra.mrb[0].mxu0 %v390
        %v584 = vpop.f32.mrb[0].mxu0
        %v585 = vadd.f32 %v306, %v584
        %v586 = vpop.f32.mrb[0].mxu0
        %v587 = vpop.f32.mrb[0].mxu0
        %v588 = vadd.f32 %v306, %v587
        %v589 = vpop.f32.mrb[0].mxu0
        %590 = vmatprep.mubr.bf16.mxu0 %v393
        %591 = vmatmul.mubr.bf16.gmra.mrb[0].mxu0 %v392
        %v592 = vpop.f32.mrb[0].mxu0
        %v593 = vadd.f32 %v306, %v592
        %v594 = vpop.f32.mrb[0].mxu0
        %v595 = vpop.f32.mrb[0].mxu0
        %v596 = vadd.f32 %v306, %v595
        %v597 = vpop.f32.mrb[0].mxu0
        %598 = vmatprep.mubr.bf16.mxu0 %v395
        %599 = vmatmul.mubr.bf16.gmra.mrb[0].mxu0 %v394
        %v600 = vpop.f32.mrb[0].mxu0
        %v601 = vadd.f32 %v306, %v600
        %v602 = vpop.f32.mrb[0].mxu0
        %v603 = vpop.f32.mrb[0].mxu0
        %v604 = vadd.f32 %v306, %v603
        %v605 = vpop.f32.mrb[0].mxu0
        %606 = vmatprep.mubr.bf16.mxu0 %v397
        %607 = vmatmul.mubr.bf16.gmra.mrb[0].mxu0 %v396
        %v608 = vpop.f32.mrb[0].mxu0
        %v609 = vadd.f32 %v306, %v608
        %v610 = vpop.f32.mrb[0].mxu0
        %v611 = vpop.f32.mrb[0].mxu0
        %v612 = vadd.f32 %v306, %v611
        %v613 = vpop.f32.mrb[0].mxu0
        %614 = vmatprep.mubr.bf16.mxu0 %v399
        %615 = vmatmul.mubr.bf16.gmra.mrb[0].mxu0 %v398
        %v616 = vpop.f32.mrb[0].mxu0
        %v617 = vadd.f32 %v306, %v616
        %v618 = vpop.f32.mrb[0].mxu0
        %v619 = vpop.f32.mrb[0].mxu0
        %v620 = vadd.f32 %v306, %v619
        %v621 = vpop.f32.mrb[0].mxu0
        %622 = vmatprep.mubr.bf16.mxu0 %v401
        %623 = vmatmul.mubr.bf16.gmra.mrb[0].mxu0 %v400
        %v624 = vpop.f32.mrb[0].mxu0
        %v625 = vadd.f32 %v306, %v624
        %v626 = vpop.f32.mrb[0].mxu0
        %v627 = vpop.f32.mrb[0].mxu0
        %v628 = vadd.f32 %v306, %v627
        %v629 = vpop.f32.mrb[0].mxu0
        %630 = vmatprep.mubr.bf16.mxu0 %v403
        %631 = vmatmul.mubr.bf16.gmra.mrb[0].mxu0 %v402
        %v632 = vpop.f32.mrb[0].mxu0
        %v633 = vadd.f32 %v306, %v632
        %v634 = vpop.f32.mrb[0].mxu0
        %v635 = vpop.f32.mrb[0].mxu0
        %v636 = vadd.f32 %v306, %v635
        %v637 = vpop.f32.mrb[0].mxu0
        %638 = vmatprep.mubr.bf16.mxu0 %v405
        %639 = vmatmul.mubr.bf16.gmra.mrb[0].mxu0 %v404
        %v640 = vpop.f32.mrb[0].mxu0
        %v641 = vadd.f32 %v306, %v640
        %v642 = vpop.f32.mrb[0].mxu0
        %v643 = vpop.f32.mrb[0].mxu0
        %v644 = vadd.f32 %v306, %v643
        %v645 = vpop.f32.mrb[0].mxu0
        %646 = vmatprep.mubr.bf16.mxu0 %v407
        %647 = vmatmul.mubr.bf16.gmra.mrb[0].mxu0 %v406
        %v648 = vpop.f32.mrb[0].mxu0
        %v649 = vadd.f32 %v306, %v648
        %v650 = vpop.f32.mrb[0].mxu0
        %v651 = vpop.f32.mrb[0].mxu0
        %v652 = vadd.f32 %v306, %v651
        %v653 = vpop.f32.mrb[0].mxu0
        %654 = vmatprep.mubr.bf16.mxu0 %v409
        %655 = vmatmul.mubr.bf16.gmra.mrb[0].mxu0 %v408
        %v656 = vpop.f32.mrb[0].mxu0
        %v657 = vadd.f32 %v306, %v656
        %v658 = vpop.f32.mrb[0].mxu0
        %v659 = vpop.f32.mrb[0].mxu0
        %v660 = vadd.f32 %v306, %v659
        %v661 = vpop.f32.mrb[0].mxu0
        %662 = vmatprep.mubr.bf16.mxu0 %v411
        %663 = vmatmul.mubr.bf16.gmra.mrb[0].mxu0 %v410
        %v664 = vpop.f32.mrb[0].mxu0
        %v665 = vadd.f32 %v306, %v664
        %v666 = vpop.f32.mrb[0].mxu0
        %v667 = vpop.f32.mrb[0].mxu0
        %v668 = vadd.f32 %v306, %v667
        %v669 = vpop.f32.mrb[0].mxu0
        %670 = vdwg.mxu0
        %v671 = vmax.f32 %v569, 0.0
        %v672 = vmax.f32 %v572, 0.0
        %v673 = vmax.f32 %v577, 0.0
        %v674 = vmax.f32 %v580, 0.0
        %v675 = vmax.f32 %v585, 0.0
        %v676 = vmax.f32 %v588, 0.0
        %v677 = vmax.f32 %v593, 0.0
        %v678 = vmax.f32 %v596, 0.0
        %v679 = vmax.f32 %v601, 0.0
        %v680 = vmax.f32 %v604, 0.0
        %v681 = vmax.f32 %v609, 0.0
        %v682 = vmax.f32 %v612, 0.0
        %v683 = vmax.f32 %v617, 0.0
        %v684 = vmax.f32 %v620, 0.0
        %v685 = vmax.f32 %v625, 0.0
        %v686 = vmax.f32 %v628, 0.0
        %v687 = vmax.f32 %v633, 0.0
        %v688 = vmax.f32 %v636, 0.0
        %v689 = vmax.f32 %v641, 0.0
        %v690 = vmax.f32 %v644, 0.0
        %v691 = vmax.f32 %v649, 0.0
        %v692 = vmax.f32 %v652, 0.0
        %v693 = vmax.f32 %v657, 0.0
        %v694 = vmax.f32 %v660, 0.0
        %v695 = vmax.f32 %v665, 0.0
        %v696 = vmax.f32 %v668, 0.0
        %v697 = vpack.c.bf16 %v672, %v671
        %v698 = vpack.c.bf16 %v674, %v673
        %v699 = vpack.c.bf16 %v676, %v675
        %v700 = vpack.c.bf16 %v678, %v677
        %v701 = vpack.c.bf16 %v680, %v679
        %v702 = vpack.c.bf16 %v682, %v681
        %v703 = vpack.c.bf16 %v684, %v683
        %v704 = vpack.c.bf16 %v686, %v685
        %v705 = vpack.c.bf16 %v688, %v687
        %v706 = vpack.c.bf16 %v690, %v689
        %v707 = vpack.c.bf16 %v692, %v691
        %v708 = vpack.c.bf16 %v694, %v693
        %v709 = vpack.c.bf16 %v696, %v695
        %v723 = vunpack.c.l.b16 %v697
        %v724 = vunpack.c.h.b16 %v697
        %v725 = vunpack.c.l.b16 %v698
        %v726 = vunpack.c.h.b16 %v698
        %v727 = vunpack.c.l.b16 %v699
        %v728 = vunpack.c.h.b16 %v699
        %v729 = vunpack.c.l.b16 %v700
        %v730 = vunpack.c.h.b16 %v700
        %v731 = vunpack.c.l.b16 %v701
        %v732 = vunpack.c.h.b16 %v701
        %v733 = vunpack.c.l.b16 %v702
        %v734 = vunpack.c.h.b16 %v702
        %v735 = vunpack.c.l.b16 %v703
        %v736 = vunpack.c.h.b16 %v703
        %v737 = vunpack.c.l.b16 %v704
        %v738 = vunpack.c.h.b16 %v704
        %v739 = vunpack.c.l.b16 %v705
        %v740 = vunpack.c.h.b16 %v705
        %v741 = vunpack.c.l.b16 %v706
        %v742 = vunpack.c.h.b16 %v706
        %v743 = vunpack.c.l.b16 %v707
        %v744 = vunpack.c.h.b16 %v707
        %v745 = vunpack.c.l.b16 %v708
        %v746 = vunpack.c.h.b16 %v708
        %v747 = vunpack.c.l.b16 %v709
        %v748 = vunpack.c.h.b16 %v709
        %v749 = vpack.c.b16 %v723, %v723
        %v750 = vpack.c.b16 %v724, %v724
        %v751 = vpack.c.b16 %v725, %v725
        %v752 = vpack.c.b16 %v726, %v726
        %v753 = vpack.c.b16 %v727, %v727
        %v754 = vpack.c.b16 %v728, %v728
        %v755 = vpack.c.b16 %v729, %v729
        %v756 = vpack.c.b16 %v730, %v730
        %v757 = vpack.c.b16 %v731, %v731
        %v758 = vpack.c.b16 %v732, %v732
        %v759 = vpack.c.b16 %v733, %v733
        %v760 = vpack.c.b16 %v734, %v734
        %v761 = vpack.c.b16 %v735, %v735
        %v762 = vpack.c.b16 %v736, %v736
        %v763 = vpack.c.b16 %v737, %v737
        %v764 = vpack.c.b16 %v738, %v738
        %v765 = vpack.c.b16 %v739, %v739
        %v766 = vpack.c.b16 %v740, %v740
        %v767 = vpack.c.b16 %v741, %v741
        %v768 = vpack.c.b16 %v742, %v742
        %v769 = vpack.c.b16 %v743, %v743
        %v770 = vpack.c.b16 %v744, %v744
        %v771 = vpack.c.b16 %v745, %v745
        %v772 = vpack.c.b16 %v746, %v746
        %v773 = vpack.c.b16 %v747, %v747
        %v774 = vpack.c.b16 %v748, %v748
        %801 = vst [vmem:[%s236] sm:$0xf] %v749
        %802 = vst [vmem:[%s236 + $0x4] sm:$0xf] %v750
        %803 = vst [vmem:[%s236 + $0x8] sm:$0xf] %v751
        %804 = vst [vmem:[%s236 + $0xc] sm:$0xf] %v752
        %805 = vst [vmem:[%s236 + $0x10] sm:$0xf] %v753
        %806 = vst [vmem:[%s236 + $0x14] sm:$0xf] %v754
        %807 = vst [vmem:[%s236 + $0x18] sm:$0xf] %v755
        %808 = vst [vmem:[%s236 + $0x1c] sm:$0xf] %v756
        %809 = vst [vmem:[%s236 + $0x20] sm:$0xf] %v757
        %810 = vst [vmem:[%s236 + $0x24] sm:$0xf] %v758
        %811 = vst [vmem:[%s236 + $0x28] sm:$0xf] %v759
        %812 = vst [vmem:[%s236 + $0x2c] sm:$0xf] %v760
        %813 = vst [vmem:[%s236 + $0x30] sm:$0xf] %v761
        %814 = vst [vmem:[%s236 + $0x34] sm:$0xf] %v762
        %815 = vst [vmem:[%s236 + $0x38] sm:$0xf] %v763
        %816 = vst [vmem:[%s236 + $0x3c] sm:$0xf] %v764
        %817 = vst [vmem:[%s236 + $0x40] sm:$0xf] %v765
        %818 = vst [vmem:[%s236 + $0x44] sm:$0xf] %v766
        %819 = vst [vmem:[%s236 + $0x48] sm:$0xf] %v767
        %820 = vst [vmem:[%s236 + $0x4c] sm:$0xf] %v768
        %821 = vst [vmem:[%s236 + $0x50] sm:$0xf] %v769
        %822 = vst [vmem:[%s236 + $0x54] sm:$0xf] %v770
        %823 = vst [vmem:[%s236 + $0x58] sm:$0xf] %v771
        %824 = vst [vmem:[%s236 + $0x5c] sm:$0xf] %v772
        %825 = vst [vmem:[%s236 + $0x60] sm:$0xf] %v773
        %826 = vst [vmem:[%s236 + $0x64] sm:$0xf] %v774
        %s827 = sand.u32 %s121, 1
        %s828 = scalar_lea.sflag [#allocation4], %s827
        %s829 = sand.u32 %s121, 1
        %s830 = smul.addr %s829, 104
        %s831 = scalar_lea.vmem [#allocation7], %s830
        // Predicated region
        $region41: #{tpu_custom_call.1} parent=31 // pred_check
          %p832 = pneg %p131
        $region42: #{tpu_custom_call.1} parent=31 // pred_check_branch
          %834 = sbr.rel (%p832) target = $region44
        $region43: #{tpu_custom_call.1} parent=31 // pred_region
          %s835 = smul.u32 26, %s25
          %s837 = ssub.s32 1664, 1664
          %838 = vsyncadd %s828, %s837
          %s839 = sadd.s32 %s26, %s835
          %s840 = smul.addr %s839, 64
          %s841 = scalar_lea.hbm %s3, %s840
          %s842 = sshll.u32 %s831, 4
          %s843 = int_to_ptr.vmem [resolvable:$true] %s842
          %848 = dma.vmem_to_hbm [thread:$0]  %s843, 1664, %s841, %s828, 64, 64, 4
        $region44: #{tpu_custom_call.1} parent=31 // pred_fallthru
          _
      $region32: #{tpu_custom_call.1} parent=5 // pred_fallthru
        _
      %p849 = scmp.le.s32.totalorder 2, %s16
      // Predicated region
      $region45: #{tpu_custom_call.1} parent=5 // pred_check
        %p850 = pneg %p849
      $region46: #{tpu_custom_call.1} parent=5 // pred_check_branch
        %852 = sbr.rel (%p850) target = $region48
      $region47: #{tpu_custom_call.1} parent=5 // pred_region
        %s853 = ssub.s32 %s16, 2
        // Predicated region
        $region49: #{tpu_custom_call.1} parent=47 // pred_check
          %p854 = pneg %p137
        $region50: #{tpu_custom_call.1} parent=47 // pred_check_branch
          %856 = sbr.rel (%p854) target = $region52
        $region51: #{tpu_custom_call.1} parent=47 // pred_region
          %s857 = sand.u32 %s122, 1
          %s858 = scalar_lea.sflag [#allocation4], %s857
          %s859 = sand.u32 %s122, 1
          %s860 = smul.addr %s859, 104
          %s861 = scalar_lea.vmem [#allocation7], %s860
          %862 = dma.done %s858, 1664
        $region52: #{tpu_custom_call.1} parent=47 // pred_fallthru
          _
      $region48: #{tpu_custom_call.1} parent=5 // pred_fallthru
        _
    $region6: #{tpu_custom_call.1} parent=1 // loop_footer
      %s20 = sadd.s32 1, %s16
    $region7: #{tpu_custom_call.1} parent=1 // loop_footer_branch
      %15 = sbr.rel target = $region3
    $region8: #{tpu_custom_call.1} parent=1 // loop_exit
      _
    %863 = vsyncpa [#allocation3], 1
    %s864 = scalar_lea.sflag [#allocation3], 1
    %865 = vsyncpa %s864, 1
    %866 = vsyncpa [#allocation6], 1
    %867 = vsyncpa [#allocation4], 1
    %s868 = scalar_lea.sflag [#allocation4], 1
    %869 = vsyncpa %s868, 1

</llo_original>
